<compile_context>
chip_gen: v6e
topology: v6e:2x2x1
jax: 0.10.0
libtpu: 0.0.40
codegen_flags: <defaults>
</compile_context>

<pallas_src>
import jax
import jax.numpy as jnp
from jax.experimental import pallas as pl
from jax.experimental.pallas import tpu as pltpu


def simple_nn_kernel(x_ref, w1_ref, b1_ref, w2_ref, b2_ref, out_ref):
    # fc1 on the MXU: (TB, D_in) @ (D_in, H) + (1, H), ReLU on the VPU.
    h = jnp.dot(x_ref[...], w1_ref[...], preferred_element_type=jnp.float32)
    h = jnp.maximum(h + b1_ref[...], 0.0)
    # fc2 (single output unit): elementwise multiply + lane reduce (VPU + XLU)
    # instead of an (H, 1) matmul that would waste a full MXU push/pop.
    y = jnp.sum(h * w2_ref[...], axis=-1, keepdims=True)
    # b2 lives in SMEM as a lone scalar.
    out_ref[...] = (y + b2_ref[0, 0]).astype(out_ref.dtype)


def simple_nn_forward(x, w1, b1, w2_row, b2, *, batch_tile=512):
    """Fused forward: relu(x @ w1 + b1) @ w2_row.T + b2.

    x: (B, D_in) f32, w1: (D_in, H), b1: (1, H), w2_row: (1, H), b2: (1, 1).
    Returns (B, 1) f32.
    Note: the (B, 1) output lane width (<128) means masked stores; negligible
    at small B. For very large B a lane-dense output layout would be the next
    lever, but it changes the caller-visible shape so we keep (B, 1).
    """
    B, d_in = x.shape
    h_dim = w1.shape[1]

    if B <= batch_tile:
        # Launch-overhead-bound regime: no grid, whole problem in VMEM.
        return pl.pallas_call(
            simple_nn_kernel,
            out_shape=jax.ShapeDtypeStruct((B, 1), jnp.float32),
            in_specs=[
                pl.BlockSpec(memory_space=pltpu.MemorySpace.VMEM),  # x
                pl.BlockSpec(memory_space=pltpu.MemorySpace.VMEM),  # w1
                pl.BlockSpec(memory_space=pltpu.MemorySpace.VMEM),  # b1
                pl.BlockSpec(memory_space=pltpu.MemorySpace.VMEM),  # w2 row
                pl.BlockSpec(memory_space=pltpu.MemorySpace.SMEM),  # b2 scalar
            ],
            out_specs=pl.BlockSpec(memory_space=pltpu.MemorySpace.VMEM),
        )(x, w1, b1, w2_row, b2)

    # Realistic batches: tile only the batch axis. Weights/biases use constant
    # index_maps so Pallas DMAs them once and keeps them VMEM-resident; x/out
    # tiles pipeline behind compute. "parallel" lets v7x shard the batch axis
    # across its two TensorCores (harmless on v5e/v6e).
    tb = batch_tile  # divisible by 8 (sublane constraint); tiny VMEM footprint.
    return pl.pallas_call(
        simple_nn_kernel,
        out_shape=jax.ShapeDtypeStruct((B, 1), jnp.float32),
        grid_spec=pl.GridSpec(
            grid=(pl.cdiv(B, tb),),
            in_specs=[
                pl.BlockSpec((tb, d_in), lambda i: (i, 0)),          # x tile
                pl.BlockSpec((d_in, h_dim), lambda i: (0, 0)),       # w1 (resident)
                pl.BlockSpec((1, h_dim), lambda i: (0, 0)),          # b1 (resident)
                pl.BlockSpec((1, h_dim), lambda i: (0, 0)),          # w2 row (resident)
                pl.BlockSpec(memory_space=pltpu.MemorySpace.SMEM),   # b2 scalar
            ],
            out_specs=pl.BlockSpec((tb, 1), lambda i: (i, 0)),
        ),
        compiler_params=pltpu.CompilerParams(
            dimension_semantics=("parallel",)),
    )(x, w1, b1, w2_row, b2)


def init_params(key, input_dim, hidden_dim):
    # Deterministic init mimicking nn.Linear's uniform(-1/sqrt(fan_in), ...).
    k1, k2, k3, k4 = jax.random.split(key, 4)
    bound1 = 1.0 / jnp.sqrt(jnp.float32(input_dim))
    bound2 = 1.0 / jnp.sqrt(jnp.float32(hidden_dim))
    # fc1 weight stored as (in, out) so the kernel computes x @ w1.
    w1 = jax.random.uniform(k1, (input_dim, hidden_dim), jnp.float32, -bound1, bound1)
    b1 = jax.random.uniform(k2, (1, hidden_dim), jnp.float32, -bound1, bound1)
    # fc2 weight stored as a (1, hidden) row for multiply + lane-reduce.
    w2 = jax.random.uniform(k3, (1, hidden_dim), jnp.float32, -bound2, bound2)
    b2 = jax.random.uniform(k4, (1, 1), jnp.float32, -bound2, bound2)
    return w1, b1, w2, b2


if __name__ == "__main__":
    key = jax.random.PRNGKey(0)
    batch, input_dim, hidden_dim = 8, 32, 32

    kx, kp, kx2 = jax.random.split(key, 3)
    x = jax.random.normal(kx, (batch, input_dim), jnp.float32)
    w1, b1, w2, b2 = init_params(kp, input_dim, hidden_dim)

    def ref_fn(inp):
        return jnp.maximum(inp @ w1 + b1, 0.0) @ w2.T + b2

    # Small-batch path (grid-less).
    out = jax.block_until_ready(simple_nn_forward(x, w1, b1, w2, b2))
    assert out.shape == (batch, 1)
    assert jnp.allclose(out, ref_fn(x), atol=1e-4, rtol=1e-4), "mismatch (small batch)"

    # Batch-tiled path (exercises grid + 'parallel' batch axis).
    big_batch = 1024
    xb = jax.random.normal(kx2, (big_batch, input_dim), jnp.float32)
    out_b = jax.block_until_ready(
        simple_nn_forward(xb, w1, b1, w2, b2, batch_tile=512))
    assert out_b.shape == (big_batch, 1)
    assert jnp.allclose(out_b, ref_fn(xb), atol=1e-4, rtol=1e-4), "mismatch (tiled batch)"

    print("KERNEL_OK")
</pallas_src>

<mosaic_0001>
module attributes {stable_mosaic.version = 11 : i64} {
  func.func @simple_nn_kernel(%arg0: memref<8x32xf32, #tpu.memory_space<vmem>>, %arg1: memref<32x32xf32, #tpu.memory_space<vmem>>, %arg2: memref<1x32xf32, #tpu.memory_space<vmem>>, %arg3: memref<1x32xf32, #tpu.memory_space<vmem>>, %arg4: memref<1x1xf32, #tpu.memory_space<smem>>, %arg5: memref<8x1xf32, #tpu.memory_space<vmem>>) attributes {dimension_semantics = [], scalar_prefetch = 0 : i64, scratch_operands = 0 : i64, tpu.core_type = #tpu.core_type<tc>} {
    %c0 = arith.constant 0 : index
    %c0_0 = arith.constant 0 : index
    %0 = vector.load %arg0[%c0, %c0_0] : memref<8x32xf32, #tpu.memory_space<vmem>>, vector<8x32xf32>
    %c0_1 = arith.constant 0 : index
    %c0_2 = arith.constant 0 : index
    %1 = vector.load %arg1[%c0_1, %c0_2] : memref<32x32xf32, #tpu.memory_space<vmem>>, vector<32x32xf32>
    %cst = arith.constant dense<0.000000e+00> : vector<8x32xf32>
    %2 = tpu.matmul %0, %1, %cst {dimension_numbers = #tpu.dot_dimension_numbers<[1], [0], [0], [1], [0, 0, 1, 1], [], []>} : vector<8x32xf32>, vector<32x32xf32>, vector<8x32xf32> -> vector<8x32xf32>
    %c0_3 = arith.constant 0 : index
    %c0_4 = arith.constant 0 : index
    %3 = vector.load %arg2[%c0_3, %c0_4] : memref<1x32xf32, #tpu.memory_space<vmem>>, vector<1x32xf32>
    %4 = vector.broadcast %3 : vector<1x32xf32> to vector<8x32xf32>
    %5 = arith.addf %2, %4 : vector<8x32xf32>
    %cst_5 = arith.constant 0.000000e+00 : f32
    %6 = vector.broadcast %cst_5 : f32 to vector<8x32xf32>
    %7 = arith.maximumf %5, %6 : vector<8x32xf32>
    %c0_6 = arith.constant 0 : index
    %c0_7 = arith.constant 0 : index
    %8 = vector.load %arg3[%c0_6, %c0_7] : memref<1x32xf32, #tpu.memory_space<vmem>>, vector<1x32xf32>
    %9 = vector.broadcast %8 : vector<1x32xf32> to vector<8x32xf32>
    %10 = arith.mulf %7, %9 : vector<8x32xf32>
    %cst_8 = arith.constant dense<0.000000e+00> : vector<8xf32>
    %11 = vector.multi_reduction <add>, %10, %cst_8 [1] : vector<8x32xf32> to vector<8xf32>
    %12 = vector.shape_cast %11 : vector<8xf32> to vector<8x1xf32>
    %c0_9 = arith.constant 0 : index
    %c0_10 = arith.constant 0 : index
    %13 = memref.load %arg4[%c0_9, %c0_10] : memref<1x1xf32, #tpu.memory_space<smem>>
    %14 = vector.broadcast %13 : f32 to vector<8x1xf32>
    %15 = arith.addf %12, %14 : vector<8x1xf32>
    %c0_11 = arith.constant 0 : index
    %c0_12 = arith.constant 0 : index
    %16 = vector.load %arg5[%c0_11, %c0_12] : memref<8x1xf32, #tpu.memory_space<vmem>>, vector<8x1xf32>
    tpu.vector_store %arg5[%c0_11, %c0_12], %15 {strides = array<i32>} : memref<8x1xf32, #tpu.memory_space<vmem>>, vector<8x1xf32>,
    return
  }
}

</mosaic_0001>

<llo_original>
// kernel: tpu_custom_call.1
$region0: #{tpu_custom_call.1}
  #allocation0 [shape = 'u32[]', space=smem, size = 0x4, offset = 0x4, fixed_abs, tag = 'smem constant byte address 0x4 - core index']
  #allocation1 [shape = 'u32[144,128]{1,0:T(1,128)}', space=vmem, size = 0x12000, scoped, tag = 'internal scratch']
  #allocation2 [shape = 'f32[1,1]{1,0:T(1,128)S(6)}', space=smem, size = 0x200, scoped, tag = 'scoped memory for tpu_custom_call.1']
  %s0 = inlined_call_operand.hbm [shape: f32[8,32], index: 0, kind: input, shape index: {}]
  %s1 = inlined_call_operand.hbm [shape: f32[32,32], index: 1, kind: input, shape index: {}]
  %s2 = inlined_call_operand.vmem [shape: f32[1,32], index: 2, kind: input, shape index: {}]
  %s3 = inlined_call_operand.vmem [shape: f32[1,32], index: 3, kind: input, shape index: {}]
  %s4 = inlined_call_operand.<no memory space> [shape: f32[1,1], index: 4, kind: input, shape index: {}]
  %s5 = inlined_call_operand.vmem [shape: f32[8,1], index: 5, kind: output, shape index: {}]
  %s6 = sld [smem:[#allocation0]]
  $region38: #{tpu_custom_call.1} parent=0
    _
  %s8 = ssub.s32 1, %s6
  %s9 = scalar_select 0, %s8, %s6
  %10 = sst [smem:[#allocation2]] %s4
  $region1: #{tpu_custom_call.1} parent=0
    #allocation3 [shape = 'u8[4096]{0}', space=vmem, size = 0x1000, scoped, tag = 'input window, operand 0, single buffered']
    #allocation4 [shape = 's32[1]{0}', space=sflag, size = 0x4, scoped, tag = 'scoped memory for tpu_custom_call.1']
    #allocation5 [shape = 'u8[16384]{0}', space=vmem, size = 0x4000, scoped, tag = 'input window, operand 1, single buffered']
    #allocation6 [shape = 's32[1]{0}', space=sflag, size = 0x4, scoped, tag = 'scoped memory for tpu_custom_call.1']
    %11 = vsyncpa [#allocation4], 0
    %12 = vsyncpa [#allocation6], 0
    // Predicated region
    $region2: #{tpu_custom_call.1} parent=1 // pred_check
      _
    $region3: #{tpu_custom_call.1} parent=1 // pred_check_branch
      %14 = sbr.rel (0) target = $region5
    $region4: #{tpu_custom_call.1} parent=1 // pred_region
      %s16 = ssub.s32 128, 128
      %17 = vsyncadd [#allocation4], %s16
      %s19 = sshll.u32 [#allocation3], 4
      %s20 = int_to_ptr.vmem [resolvable:$true] %s19
      %22 = dma.hbm_to_vmem [thread:$0]  %s0, 128, %s20, [#allocation4]
    $region5: #{tpu_custom_call.1} parent=1 // pred_fallthru
      _
    // Predicated region
    $region6: #{tpu_custom_call.1} parent=1 // pred_check
      _
    $region7: #{tpu_custom_call.1} parent=1 // pred_check_branch
      %24 = sbr.rel (0) target = $region9
    $region8: #{tpu_custom_call.1} parent=1 // pred_region
      %s26 = ssub.s32 512, 512
      %27 = vsyncadd [#allocation6], %s26
      %s28 = sshll.u32 [#allocation5], 4
      %s29 = int_to_ptr.vmem [resolvable:$true] %s28
      %34 = dma.hbm_to_vmem [thread:$0]  %s1, 512, %s29, [#allocation6], 128, 128, 8
    $region9: #{tpu_custom_call.1} parent=1 // pred_fallthru
      _
    // Predicated region
    $region10: #{tpu_custom_call.1} parent=1 // pred_check
      _
    $region11: #{tpu_custom_call.1} parent=1 // pred_check_branch
      %36 = sbr.rel (0) target = $region13
    $region12: #{tpu_custom_call.1} parent=1 // pred_region
      _
    $region13: #{tpu_custom_call.1} parent=1 // pred_fallthru
      _
    // Predicated region
    $region14: #{tpu_custom_call.1} parent=1 // pred_check
      _
    $region15: #{tpu_custom_call.1} parent=1 // pred_check_branch
      %38 = sbr.rel (0) target = $region17
    $region16: #{tpu_custom_call.1} parent=1 // pred_region
      _
    $region17: #{tpu_custom_call.1} parent=1 // pred_fallthru
      _
    // Predicated region
    $region18: #{tpu_custom_call.1} parent=1 // pred_check
      _
    $region19: #{tpu_custom_call.1} parent=1 // pred_check_branch
      %40 = sbr.rel (0) target = $region21
    $region20: #{tpu_custom_call.1} parent=1 // pred_region
      _
    $region21: #{tpu_custom_call.1} parent=1 // pred_fallthru
      _
    // Predicated region
    $region22: #{tpu_custom_call.1} parent=1 // pred_check
      _
    $region23: #{tpu_custom_call.1} parent=1 // pred_check_branch
      %42 = sbr.rel (0) target = $region25
    $region24: #{tpu_custom_call.1} parent=1 // pred_region
      %43 = dma.done [#allocation4], 128
    $region25: #{tpu_custom_call.1} parent=1 // pred_fallthru
      _
    // Predicated region
    $region26: #{tpu_custom_call.1} parent=1 // pred_check
      _
    $region27: #{tpu_custom_call.1} parent=1 // pred_check_branch
      %45 = sbr.rel (0) target = $region29
    $region28: #{tpu_custom_call.1} parent=1 // pred_region
      %46 = dma.done [#allocation6], 512
    $region29: #{tpu_custom_call.1} parent=1 // pred_fallthru
      _
    %v47 = vld [vmem:[#allocation3] sm:$0xff]
    %v48 = vld [vmem:[#allocation5] sm:$0xff]
    %v49 = vld [vmem:[#allocation5 + $0x8] sm:$0xff]
    %v50 = vld [vmem:[#allocation5 + $0x10] sm:$0xff]
    %v51 = vld [vmem:[#allocation5 + $0x18] sm:$0xff]
    %v52 = vld [vmem:[%s2] sm:$0x1]
    %v54 = vlaneseq
    %v55 = vshrl.u32 %v54, 7
    %v56 = vsub.s32 0, %v55
    %v57 = vrot.slane %v52, %v56
    %vm59 = vcmask 261120
    %v61 = vsel %vm59, %v47, 0
    %63 = vmatprep.subr.mxu0 0.0
    %64 = vmatpush1.msra.mxu0 0.0
    %65 = vmatprep.subr.mxu0 0.0
    %66 = vmatpush1.msra.mxu0 0.0
    %67 = vmatprep.subr.mxu0 0.0
    %68 = vmatpush1.msra.mxu0 0.0
    %69 = vmatprep.subr.mxu0 0.0
    %70 = vmatpush1.msra.mxu0 0.0
    %71 = vmatprep.subr.mxu0 0.0
    %72 = vmatpush1.msra.mxu0 0.0
    %73 = vmatprep.subr.mxu0 0.0
    %74 = vmatpush1.msra.mxu0 0.0
    %75 = vmatprep.subr.mxu0 0.0
    %76 = vmatpush1.msra.mxu0 0.0
    %77 = vmatprep.subr.mxu0 0.0
    %78 = vmatpush1.msra.mxu0 0.0
    %79 = vmatprep.subr.mxu0 0.0
    %80 = vmatpush1.msra.mxu0 0.0
    %81 = vmatprep.subr.mxu0 0.0
    %82 = vmatpush1.msra.mxu0 0.0
    %83 = vmatprep.subr.mxu0 0.0
    %84 = vmatpush1.msra.mxu0 0.0
    %85 = vmatprep.subr.mxu0 0.0
    %86 = vmatpush1.msra.mxu0 0.0
    %87 = vmatprep.subr.mxu0 0.0
    %88 = vmatpush1.msra.mxu0 %v51
    %89 = vmatprep.subr.mxu0 0.0
    %90 = vmatpush1.msra.mxu0 %v50
    %91 = vmatprep.subr.mxu0 0.0
    %92 = vmatpush1.msra.mxu0 %v49
    %93 = vmatprep.subr.mxu0 0.0
    %94 = vmatpush1.msra.mxu0 %v48
    %95 = vmatprep.subr.mxu0 0.0
    %96 = vmatpush2.msra.mxu0 0.0
    %97 = vmatprep.subr.mxu0 0.0
    %98 = vmatpush2.msra.mxu0 0.0
    %99 = vmatprep.subr.mxu0 0.0
    %100 = vmatpush2.msra.mxu0 0.0
    %101 = vmatprep.subr.mxu0 0.0
    %102 = vmatpush2.msra.mxu0 0.0
    %103 = vmatprep.subr.mxu0 0.0
    %104 = vmatpush2.msra.mxu0 0.0
    %105 = vmatprep.subr.mxu0 0.0
    %106 = vmatpush2.msra.mxu0 0.0
    %107 = vmatprep.subr.mxu0 0.0
    %108 = vmatpush2.msra.mxu0 0.0
    %109 = vmatprep.subr.mxu0 0.0
    %110 = vmatpush2.msra.mxu0 0.0
    %111 = vmatprep.subr.mxu0 0.0
    %112 = vmatpush2.msra.mxu0 0.0
    %113 = vmatprep.subr.mxu0 0.0
    %114 = vmatpush2.msra.mxu0 0.0
    %115 = vmatprep.subr.mxu0 0.0
    %116 = vmatpush2.msra.mxu0 0.0
    %117 = vmatprep.subr.mxu0 0.0
    %118 = vmatpush2.msra.mxu0 0.0
    %119 = vmatprep.subr.mxu0 0.0
    %120 = vmatpush2.msra.mxu0 0.0
    %121 = vmatprep.subr.mxu0 0.0
    %122 = vmatpush2.msra.mxu0 0.0
    %123 = vmatprep.subr.mxu0 0.0
    %124 = vmatpush2.msra.mxu0 0.0
    %125 = vmatprep.subr.mxu0 0.0
    %126 = vmatpush2.msra.mxu0 0.0
    %127 = vmatprep.mubr.f32.mxu0 0.0
    %128 = vmatmul.mubr.f32.gmra.mxu0 %v61
    %v129 = vpop.f32.mrf.mxu0
    %v130 = vadd.f32 %v57, %v129
    %v131 = vpop.f32.mrf.mxu0
    %132 = vdwg.mxu0
    %v133 = vmax.f32 %v130, 0.0
    %v134 = vld [vmem:[%s3] sm:$0x1]
    %v136 = vlaneseq
    %v137 = vshrl.u32 %v136, 7
    %v138 = vsub.s32 0, %v137
    %v139 = vrot.slane %v134, %v138
    %v141 = vmul.f32 %v133, %v139
    %v142 = vsel %vm59, %v141, 0.0
    %143 = vadd.xlane.f32.xlu0 %v142
    %v144 = vpop.xlane.xlu0 %143
    %s145 = sld [smem:[#allocation2]]
    %v146 = vstv %s145
    %v147 = vadd.f32 %v144, %v146
    %vm148 = vcmask 7168
    %149 = vst.msk [vmem:[%s5] sm:$0xff] %vm148, %v147
    // Predicated region
    $region30: #{tpu_custom_call.1} parent=1 // pred_check
      _
    $region31: #{tpu_custom_call.1} parent=1 // pred_check_branch
      %151 = sbr.rel (0) target = $region33
    $region32: #{tpu_custom_call.1} parent=1 // pred_region
      _
    $region33: #{tpu_custom_call.1} parent=1 // pred_fallthru
      _
    // Predicated region
    $region34: #{tpu_custom_call.1} parent=1 // pred_check
      _
    $region35: #{tpu_custom_call.1} parent=1 // pred_check_branch
      %153 = sbr.rel (0) target = $region37
    $region36: #{tpu_custom_call.1} parent=1 // pred_region
      _
    $region37: #{tpu_custom_call.1} parent=1 // pred_fallthru
      _
    %154 = vsyncpa [#allocation4], 1
    %155 = vsyncpa [#allocation6], 1

</llo_original>
